<compile_context>
chip_gen: v5e
topology: v5e:2x2
jax: 0.10.0
libtpu: 0.0.40
codegen_flags: <defaults>
</compile_context>

<pallas_src>
import functools

import jax
import jax.numpy as jnp
from jax.experimental import pallas as pl
from jax.experimental.pallas import tpu as pltpu


def _choose_tiles(B, C, HW, itemsize, target_bytes=2 << 20):
    """Pick (batch_tile, hw_tile) so one x block is ~target_bytes and the last
    block dim stays a multiple of 128 (lane-dense, unmasked vst)."""
    if HW % 128 == 0:
        n128 = HW // 128
        # cap the unrolled chunk-adds in the in-kernel reduction at 32/step
        max_chunks = max(1, min(32, target_bytes // (C * 128 * itemsize)))
        chunks = max(d for d in range(1, n128 + 1)
                     if n128 % d == 0 and d <= max_chunks)
        hw_tile = 128 * chunks
    else:
        # TODO(synk): non-multiple-of-128 spatial sizes fall back to a single
        # full-HW block (legal, but stores are partially masked); pad HW on the
        # wrapper side if this becomes the hot path.
        hw_tile = HW
    per_b = C * hw_tile * itemsize
    max_bt = max(1, target_bytes // per_b)
    if B >= 2:
        # keep >=2 steps on the parallel batch axis (megacore / v7x has 2 TCs)
        max_bt = max(1, min(max_bt, B // 2))
    bt = max(d for d in range(1, B + 1) if B % d == 0 and d <= max_bt)
    return bt, hw_tile


def gate_kernel(x_ref, w1t_ref, b1r_ref, w2t_ref, b2r_ref, gate_ref, acc_ref,
                *, inv_hw):
    """Grid (nb, nhw); hw axis is the reduction ('arbitrary', last)."""
    h = pl.program_id(1)

    @pl.when(h == 0)
    def _init():
        acc_ref[...] = jnp.zeros_like(acc_ref)

    hwt = x_ref.shape[-1]
    if hwt % 128 == 0 and hwt > 128:
        # Two-stage spatial reduce: aligned 128-lane chunk adds run on the VPU
        # (co-issue with loads); only the final (bt, C, 128) -> (bt, C) reduce
        # touches the XLU. Upcast to f32 one chunk at a time (no f32 slab).
        part = x_ref[:, :, 0:128].astype(jnp.float32)
        for g in range(1, hwt // 128):
            part = part + x_ref[:, :, g * 128:(g + 1) * 128].astype(jnp.float32)
        tile_sum = jnp.sum(part, axis=-1)                       # (bt, C)
    else:
        tile_sum = jnp.sum(x_ref[...].astype(jnp.float32), axis=-1)
    acc_ref[...] += tile_sum                                    # f32 accumulator

    @pl.when(h == pl.num_programs(1) - 1)
    def _finalize():
        # divide by the TRUE spatial size (not a padded one)
        pooled = acc_ref[...] * inv_hw                          # (bt, C) f32
        # Lane-dense batched FCs (C / mid on the lane axis), executed once per
        # batch tile -> off the per-step streaming critical path.
        y1 = jnp.dot(pooled, w1t_ref[...],
                     preferred_element_type=jnp.float32) + b1r_ref[...]
        y1 = jnp.maximum(y1, 0.0)                               # (bt, mid)
        y2 = jnp.dot(y1, w2t_ref[...],
                     preferred_element_type=jnp.float32) + b2r_ref[...]
        # Emit the gate directly in the output/input dtype so pass 2 needs
        # no per-step cast.
        gate_ref[...] = jax.nn.sigmoid(y2)[..., None].astype(gate_ref.dtype)


def scale_kernel(x_ref, gate_ref, o_ref):
    # Streaming rescale entirely in the input dtype; gate (bt, C, 1)
    # broadcasts along the lane (spatial) axis.
    o_ref[...] = x_ref[...] * gate_ref[...]


@jax.jit
def ca_module(x, w1, b1, w2, b2):
    """x: (B, C, H, W) NCHW.  w1: (mid, C), b1: (mid, 1), w2: (C, mid), b2: (C, 1)."""
    B, C, H, W = x.shape
    HW = H * W
    mid = w1.shape[0]
    x_flat = x.reshape(B, C, HW)

    bt, hw_tile = _choose_tiles(B, C, HW, x.dtype.itemsize)
    nb, nhw = B // bt, HW // hw_tile

    # Transposed weights / row biases so the batched FC is lane-dense.
    w1t = jnp.transpose(w1)          # (C, mid)
    w2t = jnp.transpose(w2)          # (mid, C)
    b1r = b1.reshape(1, mid)
    b2r = b2.reshape(1, C)
    inv_hw = 1.0 / float(HW)

    # ---- pass 1: pooled gates, shape (B, C, 1) in x.dtype -------------------
    gate = pl.pallas_call(
        functools.partial(gate_kernel, inv_hw=inv_hw),
        out_shape=jax.ShapeDtypeStruct((B, C, 1), x.dtype),
        grid_spec=pltpu.PrefetchScalarGridSpec(
            num_scalar_prefetch=0,
            grid=(nb, nhw),
            in_specs=[
                pl.BlockSpec((bt, C, hw_tile), lambda b, h: (b, 0, h)),
                pl.BlockSpec((C, mid), lambda b, h: (0, 0)),
                pl.BlockSpec((1, mid), lambda b, h: (0, 0)),
                pl.BlockSpec((mid, C), lambda b, h: (0, 0)),
                pl.BlockSpec((1, C), lambda b, h: (0, 0)),
            ],
            out_specs=pl.BlockSpec((bt, C, 1), lambda b, h: (b, 0, 0)),
            scratch_shapes=[pltpu.VMEM((bt, C), jnp.float32)],
        ),
        compiler_params=pltpu.CompilerParams(
            dimension_semantics=("parallel", "arbitrary")),
    )(x_flat, w1t, b1r, w2t, b2r)

    # ---- pass 2: streaming rescale, both grid axes parallel ----------------
    out = pl.pallas_call(
        scale_kernel,
        out_shape=jax.ShapeDtypeStruct((B, C, HW), x.dtype),
        grid_spec=pltpu.PrefetchScalarGridSpec(
            num_scalar_prefetch=0,
            grid=(nb, nhw),
            in_specs=[
                pl.BlockSpec((bt, C, hw_tile), lambda b, h: (b, 0, h)),
                pl.BlockSpec((bt, C, 1), lambda b, h: (b, 0, 0)),
            ],
            out_specs=pl.BlockSpec((bt, C, hw_tile), lambda b, h: (b, 0, h)),
        ),
        compiler_params=pltpu.CompilerParams(
            dimension_semantics=("parallel", "parallel")),
    )(x_flat, gate)

    return out.reshape(B, C, H, W)


def ca_reference(x, w1, b1, w2, b2):
    """Pure-JAX reference replicating the PyTorch forward."""
    pooled = jnp.mean(x, axis=(2, 3))                     # (B, C)
    y1 = jnp.maximum(pooled @ w1.T + b1[:, 0], 0.0)       # (B, mid)
    y2 = jax.nn.sigmoid(y1 @ w2.T + b2[:, 0])             # (B, C)
    return x * y2[:, :, None, None]


if __name__ == "__main__":
    # Small shapes consistent with the module: channels=4, reduction=2.
    B, C, H, W = 2, 4, 16, 16
    reduction = 2
    mid = C // reduction

    key = jax.random.PRNGKey(0)
    kx, k1, k2, k3, k4 = jax.random.split(key, 5)

    x = jax.random.normal(kx, (B, C, H, W), dtype=jnp.float32)
    # 1x1 conv weights (out, in, 1, 1) -> stored as (out, in); biases as (out, 1).
    w1 = jax.random.normal(k1, (mid, C), dtype=jnp.float32) * 0.1
    b1 = jax.random.normal(k2, (mid, 1), dtype=jnp.float32) * 0.1
    w2 = jax.random.normal(k3, (C, mid), dtype=jnp.float32) * 0.1
    b2 = jax.random.normal(k4, (C, 1), dtype=jnp.float32) * 0.1

    out = ca_module(x, w1, b1, w2, b2)
    out = jax.block_until_ready(out)

    ref = ca_reference(x, w1, b1, w2, b2)
    assert out.shape == (B, C, H, W)
    assert jnp.allclose(out, ref, atol=1e-5, rtol=1e-5), "mismatch vs reference"

    print("KERNEL_OK")
</pallas_src>

<mosaic_0001>
module attributes {stable_mosaic.version = 11 : i64} {
  func.func @gate_kernel(%arg0: i32, %arg1: i32, %arg2: memref<1x4x256xf32, #tpu.memory_space<vmem>>, %arg3: memref<4x2xf32, #tpu.memory_space<vmem>>, %arg4: memref<1x2xf32, #tpu.memory_space<vmem>>, %arg5: memref<2x4xf32, #tpu.memory_space<vmem>>, %arg6: memref<1x4xf32, #tpu.memory_space<vmem>>, %arg7: memref<1x4x1xf32, #tpu.memory_space<vmem>>, %arg8: memref<1x4xf32, #tpu.memory_space<vmem>>) attributes {dimension_semantics = [#tpu.dimension_semantics<parallel>, #tpu.dimension_semantics<arbitrary>], iteration_bounds = array<i64: 2, 1>, scalar_prefetch = 0 : i64, scratch_operands = 1 : i64, tpu.core_type = #tpu.core_type<tc>, window_params = [{transform_indices = @transform_0, window_bounds = array<i64: 1, 4, 256>}, {pipeline_mode = #tpu.pipeline_mode<synchronous>, transform_indices = @transform_1, window_bounds = array<i64: 4, 2>}, {pipeline_mode = #tpu.pipeline_mode<synchronous>, transform_indices = @transform_2, window_bounds = array<i64: 1, 2>}, {pipeline_mode = #tpu.pipeline_mode<synchronous>, transform_indices = @transform_3, window_bounds = array<i64: 2, 4>}, {pipeline_mode = #tpu.pipeline_mode<synchronous>, transform_indices = @transform_4, window_bounds = array<i64: 1, 4>}, {transform_indices = @transform_5, window_bounds = array<i64: 1, 4, 1>}]} {
    %c0_i32 = arith.constant 0 : i32
    %0 = arith.cmpi eq, %arg1, %c0_i32 : i32
    %1 = arith.extui %0 : i1 to i32
    %c0_i32_0 = arith.constant 0 : i32
    %2 = arith.cmpi ne, %1, %c0_i32_0 : i32
    scf.if %2 {
      %cst_11 = arith.constant 0.000000e+00 : f32
      %13 = vector.broadcast %cst_11 : f32 to vector<1x4xf32>
      %c0_12 = arith.constant 0 : index
      %c0_13 = arith.constant 0 : index
      %14 = vector.load %arg8[%c0_12, %c0_13] : memref<1x4xf32, #tpu.memory_space<vmem>>, vector<1x4xf32>
      tpu.vector_store %arg8[%c0_12, %c0_13], %13 {strides = array<i32>} : memref<1x4xf32, #tpu.memory_space<vmem>>, vector<1x4xf32>,
    } else {
    }
    %c0 = arith.constant 0 : index
    %c0_1 = arith.constant 0 : index
    %c0_2 = arith.constant 0 : index
    %3 = vector.load %arg2[%c0, %c0_1, %c0_2] : memref<1x4x256xf32, #tpu.memory_space<vmem>>, vector<1x4x128xf32>
    %c0_3 = arith.constant 0 : index
    %c0_4 = arith.constant 0 : index
    %c128 = arith.constant 128 : index
    %4 = vector.load %arg2[%c0_3, %c0_4, %c128] : memref<1x4x256xf32, #tpu.memory_space<vmem>>, vector<1x4x128xf32>
    %5 = arith.addf %3, %4 : vector<1x4x128xf32>
    %cst = arith.constant dense<0.000000e+00> : vector<1x4xf32>
    %6 = vector.multi_reduction <add>, %5, %cst [2] : vector<1x4x128xf32> to vector<1x4xf32>
    %c0_5 = arith.constant 0 : index
    %c0_6 = arith.constant 0 : index
    %7 = vector.load %arg8[%c0_5, %c0_6] : memref<1x4xf32, #tpu.memory_space<vmem>>, vector<1x4xf32>
    %8 = arith.addf %7, %6 : vector<1x4xf32>
    %c0_7 = arith.constant 0 : index
    %c0_8 = arith.constant 0 : index
    %9 = vector.load %arg8[%c0_7, %c0_8] : memref<1x4xf32, #tpu.memory_space<vmem>>, vector<1x4xf32>
    tpu.vector_store %arg8[%c0_7, %c0_8], %8 {strides = array<i32>} : memref<1x4xf32, #tpu.memory_space<vmem>>, vector<1x4xf32>,
    %c0_i32_9 = arith.constant 0 : i32
    %10 = arith.cmpi eq, %arg1, %c0_i32_9 : i32
    %11 = arith.extui %10 : i1 to i32
    %c0_i32_10 = arith.constant 0 : i32
    %12 = arith.cmpi ne, %11, %c0_i32_10 : i32
    scf.if %12 {
      %c0_11 = arith.constant 0 : index
      %c0_12 = arith.constant 0 : index
      %13 = vector.load %arg8[%c0_11, %c0_12] : memref<1x4xf32, #tpu.memory_space<vmem>>, vector<1x4xf32>
      %cst_13 = arith.constant 3.906250e-03 : f32
      %14 = vector.broadcast %cst_13 : f32 to vector<1x4xf32>
      %15 = arith.mulf %13, %14 : vector<1x4xf32>
      %c0_14 = arith.constant 0 : index
      %c0_15 = arith.constant 0 : index
      %16 = vector.load %arg3[%c0_14, %c0_15] : memref<4x2xf32, #tpu.memory_space<vmem>>, vector<4x2xf32>
      %cst_16 = arith.constant dense<0.000000e+00> : vector<1x2xf32>
      %17 = tpu.matmul %15, %16, %cst_16 {dimension_numbers = #tpu.dot_dimension_numbers<[1], [0], [0], [1], [0, 0, 1, 1], [], []>} : vector<1x4xf32>, vector<4x2xf32>, vector<1x2xf32> -> vector<1x2xf32>
      %c0_17 = arith.constant 0 : index
      %c0_18 = arith.constant 0 : index
      %18 = vector.load %arg4[%c0_17, %c0_18] : memref<1x2xf32, #tpu.memory_space<vmem>>, vector<1x2xf32>
      %19 = arith.addf %17, %18 : vector<1x2xf32>
      %cst_19 = arith.constant 0.000000e+00 : f32
      %20 = vector.broadcast %cst_19 : f32 to vector<1x2xf32>
      %21 = arith.maximumf %19, %20 : vector<1x2xf32>
      %c0_20 = arith.constant 0 : index
      %c0_21 = arith.constant 0 : index
      %22 = vector.load %arg5[%c0_20, %c0_21] : memref<2x4xf32, #tpu.memory_space<vmem>>, vector<2x4xf32>
      %cst_22 = arith.constant dense<0.000000e+00> : vector<1x4xf32>
      %23 = tpu.matmul %21, %22, %cst_22 {dimension_numbers = #tpu.dot_dimension_numbers<[1], [0], [0], [1], [0, 0, 1, 1], [], []>} : vector<1x2xf32>, vector<2x4xf32>, vector<1x4xf32> -> vector<1x4xf32>
      %c0_23 = arith.constant 0 : index
      %c0_24 = arith.constant 0 : index
      %24 = vector.load %arg6[%c0_23, %c0_24] : memref<1x4xf32, #tpu.memory_space<vmem>>, vector<1x4xf32>
      %25 = arith.addf %23, %24 : vector<1x4xf32>
      %26 = arith.negf %25 : vector<1x4xf32>
      %27 = math.exp %26 : vector<1x4xf32>
      %cst_25 = arith.constant 1.000000e+00 : f32
      %28 = vector.broadcast %cst_25 : f32 to vector<1x4xf32>
      %29 = arith.addf %28, %27 : vector<1x4xf32>
      %30 = arith.divf %28, %29 : vector<1x4xf32>
      %31 = vector.shape_cast %30 : vector<1x4xf32> to vector<1x4x1xf32>
      %c0_26 = arith.constant 0 : index
      %c0_27 = arith.constant 0 : index
      %c0_28 = arith.constant 0 : index
      %32 = vector.load %arg7[%c0_26, %c0_27, %c0_28] : memref<1x4x1xf32, #tpu.memory_space<vmem>>, vector<1x4x1xf32>
      tpu.vector_store %arg7[%c0_26, %c0_27, %c0_28], %31 {strides = array<i32>} : memref<1x4x1xf32, #tpu.memory_space<vmem>>, vector<1x4x1xf32>,
    } else {
    }
    return
  }
  func.func @transform_0(%arg0: i32, %arg1: i32) -> (i32, i32, i32) {
    %c0_i32 = arith.constant 0 : i32
    %c0_i32_0 = arith.constant 0 : i32
    return %arg0, %c0_i32, %arg1 : i32, i32, i32
  }
  func.func @transform_1(%arg0: i32, %arg1: i32) -> (i32, i32) {
    %c0_i32 = arith.constant 0 : i32
    %c0_i32_0 = arith.constant 0 : i32
    %c0_i32_1 = arith.constant 0 : i32
    return %c0_i32, %c0_i32_0 : i32, i32
  }
  func.func @transform_2(%arg0: i32, %arg1: i32) -> (i32, i32) {
    %c0_i32 = arith.constant 0 : i32
    %c0_i32_0 = arith.constant 0 : i32
    %c0_i32_1 = arith.constant 0 : i32
    return %c0_i32, %c0_i32_0 : i32, i32
  }
  func.func @transform_3(%arg0: i32, %arg1: i32) -> (i32, i32) {
    %c0_i32 = arith.constant 0 : i32
    %c0_i32_0 = arith.constant 0 : i32
    %c0_i32_1 = arith.constant 0 : i32
    return %c0_i32, %c0_i32_0 : i32, i32
  }
  func.func @transform_4(%arg0: i32, %arg1: i32) -> (i32, i32) {
    %c0_i32 = arith.constant 0 : i32
    %c0_i32_0 = arith.constant 0 : i32
    %c0_i32_1 = arith.constant 0 : i32
    return %c0_i32, %c0_i32_0 : i32, i32
  }
  func.func @transform_5(%arg0: i32, %arg1: i32) -> (i32, i32, i32) {
    %c0_i32 = arith.constant 0 : i32
    %c0_i32_0 = arith.constant 0 : i32
    %c0_i32_1 = arith.constant 0 : i32
    return %arg0, %c0_i32, %c0_i32_0 : i32, i32, i32
  }
}

module attributes {stable_mosaic.version = 11 : i64} {
  func.func @scale_kernel(%arg0: i32, %arg1: i32, %arg2: memref<1x4x256xf32, #tpu.memory_space<vmem>>, %arg3: memref<1x4x1xf32, #tpu.memory_space<vmem>>, %arg4: memref<1x4x256xf32, #tpu.memory_space<vmem>>) attributes {dimension_semantics = [#tpu.dimension_semantics<parallel>, #tpu.dimension_semantics<parallel>], iteration_bounds = array<i64: 2, 1>, scalar_prefetch = 0 : i64, scratch_operands = 0 : i64, tpu.core_type = #tpu.core_type<tc>, window_params = [{transform_indices = @transform_0, window_bounds = array<i64: 1, 4, 256>}, {transform_indices = @transform_1, window_bounds = array<i64: 1, 4, 1>}, {transform_indices = @transform_2, window_bounds = array<i64: 1, 4, 256>}]} {
    %c0 = arith.constant 0 : index
    %c0_0 = arith.constant 0 : index
    %c0_1 = arith.constant 0 : index
    %0 = vector.load %arg2[%c0, %c0_0, %c0_1] : memref<1x4x256xf32, #tpu.memory_space<vmem>>, vector<1x4x256xf32>
    %c0_2 = arith.constant 0 : index
    %c0_3 = arith.constant 0 : index
    %c0_4 = arith.constant 0 : index
    %1 = vector.load %arg3[%c0_2, %c0_3, %c0_4] : memref<1x4x1xf32, #tpu.memory_space<vmem>>, vector<1x4x1xf32>
    %2 = vector.broadcast %1 : vector<1x4x1xf32> to vector<1x4x256xf32>
    %3 = arith.mulf %0, %2 : vector<1x4x256xf32>
    %c0_5 = arith.constant 0 : index
    %c0_6 = arith.constant 0 : index
    %c0_7 = arith.constant 0 : index
    %4 = vector.load %arg4[%c0_5, %c0_6, %c0_7] : memref<1x4x256xf32, #tpu.memory_space<vmem>>, vector<1x4x256xf32>
    tpu.vector_store %arg4[%c0_5, %c0_6, %c0_7], %3 {strides = array<i32>} : memref<1x4x256xf32, #tpu.memory_space<vmem>>, vector<1x4x256xf32>,
    return
  }
  func.func @transform_0(%arg0: i32, %arg1: i32) -> (i32, i32, i32) {
    %c0_i32 = arith.constant 0 : i32
    %c0_i32_0 = arith.constant 0 : i32
    return %arg0, %c0_i32, %arg1 : i32, i32, i32
  }
  func.func @transform_1(%arg0: i32, %arg1: i32) -> (i32, i32, i32) {
    %c0_i32 = arith.constant 0 : i32
    %c0_i32_0 = arith.constant 0 : i32
    %c0_i32_1 = arith.constant 0 : i32
    return %arg0, %c0_i32, %c0_i32_0 : i32, i32, i32
  }
  func.func @transform_2(%arg0: i32, %arg1: i32) -> (i32, i32, i32) {
    %c0_i32 = arith.constant 0 : i32
    %c0_i32_0 = arith.constant 0 : i32
    return %arg0, %c0_i32, %arg1 : i32, i32, i32
  }
}

</mosaic_0001>

<llo_original>
// kernel: ca_module.3
$region0: #{ca_module.3}
  #allocation0 [shape = 'u32[]', space=smem, size = 0x4, offset = 0x4, fixed_abs, tag = 'smem constant byte address 0x4 - core index']
  #allocation1 [shape = 'u32[72,128]{1,0:T(1,128)}', space=vmem, size = 0x9000, scoped, tag = 'internal scratch']
  %s0 = inlined_call_operand.vmem [shape: f32[2,4,256], index: 0, kind: input, shape index: {}]
  %s1 = inlined_call_operand.vmem [shape: f32[2,4,1], index: 1, kind: input, shape index: {}]
  %s2 = inlined_call_operand.vmem [shape: f32[2,4,256], index: 2, kind: output, shape index: {}]
  %s3 = sld [smem:[#allocation0]]
  $region41: #{ca_module.3} parent=0
    _
  %s5 = ssub.s32 1, %s3
  %s6 = scalar_select 0, %s5, %s3
  loop: start=0, step=1, limit=4
  $region2: #{ca_module.3} parent=0 // loop_pre_header
    _
  $region3: #{ca_module.3} parent=0 // loop_header
    %s8 = sphi 0, %s12
    %p9 = scmp.ge.s32.totalorder %s8, 4
    %s15 = sphi 0, %s27
    %s16 = sphi 0, %s23
    %s17 = sphi 0, %s15
    %s18 = sphi 0, %s16
    %s19 = sphi 0, %s17
    %s20 = sphi 0, %s18
    %s32 = sphi 0, %s34
    %s35 = sphi 0, %s32
    %s36 = sphi 0, %s35
    %s52 = sphi 0, %s36
    %s58 = sphi 0, %s60
    %s61 = sphi 0, %s58
    %s62 = sphi 0, %s61
    %s78 = sphi 0, %s62
    %s86 = sphi 0, %s88
    %s89 = sphi 0, %s86
    %s90 = sphi 0, %s89
    %s106 = sphi 0, %s90
  $region4: #{ca_module.3} parent=0 // loop_header_branch
    %11 = sbr.rel (%p9) target = $region8
  $region5: #{ca_module.3} parent=0 // loop_body
    %s13 = ssub.s32 %s8, 1
    %s14 = ssub.s32 %s8, 2
    %s21 = sadd.s32 1, %s16
    %p22 = scmp.ge.s32.totalorder %s21, 1
    %s23 = scalar_select %p22, 0, %s21
    %s24 = sadd.s32 1, %s15
    %s25 = scalar_select %p22, %s24, %s15
    %p26 = scmp.ge.s32.totalorder %s25, 2
    %s27 = scalar_select %p26, 0, %s25
    %s28 = ssub.s32 %s15, %s27
    %s29 = ssub.s32 %s16, %s23
    %s30 = sor.u32 %s28, %s29
    %p31 = scmp.eq.s32.totalorder %s30, 0
    %s33 = sadd.s32 %s32, 1
    %s34 = scalar_select %p31, %s32, %s33
    %p37 = pneg %p31
    %p38 = scmp.eq.s32.totalorder %s8, 1
    %p39 = por %p37, %p38
    %p40 = scmp.ne.s32.totalorder %s32, %s35
    %p41 = scmp.eq.s32.totalorder %s8, 0
    %p42 = por %p40, %p41
    %p43 = scmp.ne.s32.totalorder %s32, %s35
    %p44 = scmp.eq.s32.totalorder %s13, 1
    %p45 = por %p43, %p44
    %p46 = scmp.ne.s32.totalorder %s35, %s36
    %p47 = scmp.eq.s32.totalorder %s13, 0
    %p48 = por %p46, %p47
    %p49 = scmp.ne.s32.totalorder %s35, %s36
    %p50 = scmp.eq.s32.totalorder %s14, 1
    %p51 = por %p49, %p50
    %p53 = scmp.ne.s32.totalorder %s36, %s52
    %p54 = scmp.eq.s32.totalorder %s14, 0
    %p55 = por %p53, %p54
    %s56 = ssub.s32 %s15, %s27
    %p57 = scmp.eq.s32.totalorder %s56, 0
    %s59 = sadd.s32 %s58, 1
    %s60 = scalar_select %p57, %s58, %s59
    %p63 = pneg %p57
    %p64 = scmp.eq.s32.totalorder %s8, 1
    %p65 = por %p63, %p64
    %p66 = scmp.ne.s32.totalorder %s58, %s61
    %p67 = scmp.eq.s32.totalorder %s8, 0
    %p68 = por %p66, %p67
    %p69 = scmp.ne.s32.totalorder %s58, %s61
    %p70 = scmp.eq.s32.totalorder %s13, 1
    %p71 = por %p69, %p70
    %p72 = scmp.ne.s32.totalorder %s61, %s62
    %p73 = scmp.eq.s32.totalorder %s13, 0
    %p74 = por %p72, %p73
    %p75 = scmp.ne.s32.totalorder %s61, %s62
    %p76 = scmp.eq.s32.totalorder %s14, 1
    %p77 = por %p75, %p76
    %p79 = scmp.ne.s32.totalorder %s62, %s78
    %p80 = scmp.eq.s32.totalorder %s14, 0
    %p81 = por %p79, %p80
    %s82 = ssub.s32 %s15, %s27
    %s83 = ssub.s32 %s16, %s23
    %s84 = sor.u32 %s82, %s83
    %p85 = scmp.eq.s32.totalorder %s84, 0
    %s87 = sadd.s32 %s86, 1
    %s88 = scalar_select %p85, %s86, %s87
    %p91 = pneg %p85
    %p92 = scmp.eq.s32.totalorder %s8, 1
    %p93 = por %p91, %p92
    %p94 = scmp.ne.s32.totalorder %s86, %s89
    %p95 = scmp.eq.s32.totalorder %s8, 0
    %p96 = por %p94, %p95
    %p97 = scmp.ne.s32.totalorder %s86, %s89
    %p98 = scmp.eq.s32.totalorder %s13, 1
    %p99 = por %p97, %p98
    %p100 = scmp.ne.s32.totalorder %s89, %s90
    %p101 = scmp.eq.s32.totalorder %s13, 0
    %p102 = por %p100, %p101
    %p103 = scmp.ne.s32.totalorder %s89, %s90
    %p104 = scmp.eq.s32.totalorder %s14, 1
    %p105 = por %p103, %p104
    %p107 = scmp.ne.s32.totalorder %s90, %s106
    %p108 = scmp.eq.s32.totalorder %s14, 0
    %p109 = por %p107, %p108
    %p110 = scmp.le.s32.totalorder 1, %s8
    %p111 = scmp.lt.s32.totalorder %s8, 3
    %p112 = pnand %p110, %p111
    %p113 = pneg %p112
    // Predicated region
    $region9: #{ca_module.3} parent=5 // pred_check
      _
    $region10: #{ca_module.3} parent=5 // pred_check_branch
      %115 = sbr.rel (%p112) target = $region12
    $region11: #{ca_module.3} parent=5 // pred_region
      %s116 = ssub.s32 %s8, 1
    $region12: #{ca_module.3} parent=5 // pred_fallthru
      _
    %p117 = scmp.lt.s32.totalorder %s8, 2
    // Predicated region
    $region13: #{ca_module.3} parent=5 // pred_check
      %p118 = pneg %p117
    $region14: #{ca_module.3} parent=5 // pred_check_branch
      %120 = sbr.rel (%p118) target = $region16
    $region15: #{ca_module.3} parent=5 // pred_region
      // Predicated region
      $region17: #{ca_module.3} parent=15 // pred_check
        %p121 = pneg %p42
      $region18: #{ca_module.3} parent=15 // pred_check_branch
        %123 = sbr.rel (%p121) target = $region20
      $region19: #{ca_module.3} parent=15 // pred_region
        %s124 = smul.u32 2, %s16
        %p125 = scmp.lt.s32.totalorder %s15, 1
        %s126 = scalar_select %p125, %s15, 1
        %p127 = scmp.lt.s32.totalorder %s124, 1
        %s128 = scalar_select %p127, %s124, 1
        %s129 = smul.addr %s126, 2
        %s130 = sadd.s32 %s128, %s129
        %s131 = smul.addr %s130, 4
        %s132 = scalar_lea.vmem %s0, %s131
        %s133 = smul.u32 2, %s16
      $region20: #{ca_module.3} parent=15 // pred_fallthru
        _
      // Predicated region
      $region21: #{ca_module.3} parent=15 // pred_check
        %p134 = pneg %p68
      $region22: #{ca_module.3} parent=15 // pred_check_branch
        %136 = sbr.rel (%p134) target = $region24
      $region23: #{ca_module.3} parent=15 // pred_region
        %p137 = scmp.lt.s32.totalorder %s15, 1
        %s138 = scalar_select %p137, %s15, 1
        %s139 = smul.addr %s138, 4
        %s140 = scalar_lea.vmem %s1, %s139
      $region24: #{ca_module.3} parent=15 // pred_fallthru
        _
    $region16: #{ca_module.3} parent=5 // pred_fallthru
      _
    %p141 = scmp.le.s32.totalorder 1, %s8
    %p142 = scmp.lt.s32.totalorder %s8, 3
    %p143 = pnand %p141, %p142
    %p144 = pneg %p143
    // Predicated region
    $region25: #{ca_module.3} parent=5 // pred_check
      _
    $region26: #{ca_module.3} parent=5 // pred_check_branch
      %146 = sbr.rel (%p143) target = $region28
    $region27: #{ca_module.3} parent=5 // pred_region
      %s147 = ssub.s32 %s8, 1
      %s148 = smul.u32 2, %s18
      %p149 = scmp.lt.s32.totalorder %s17, 1
      %s150 = scalar_select %p149, %s17, 1
      %p151 = scmp.lt.s32.totalorder %s148, 1
      %s152 = scalar_select %p151, %s148, 1
      %s153 = smul.addr %s150, 2
      %s154 = sadd.s32 %s152, %s153
      %s155 = smul.addr %s154, 4
      %s156 = scalar_lea.vmem %s0, %s155
      %p157 = pneg %p48
      %p158 = pneg %p45
      %p159 = scmp.lt.s32.totalorder %s17, 1
      %s160 = scalar_select %p159, %s17, 1
      %s161 = smul.addr %s160, 4
      %s162 = scalar_lea.vmem %s1, %s161
      %p163 = pneg %p74
      %p164 = pneg %p71
      %p165 = pneg %p102
      %p166 = pneg %p99
      %s167 = smul.u32 2, %s18
      %p168 = scmp.lt.s32.totalorder %s17, 1
      %s169 = scalar_select %p168, %s17, 1
      %p170 = scmp.lt.s32.totalorder %s167, 1
      %s171 = scalar_select %p170, %s167, 1
      %s172 = smul.addr %s169, 2
      %s173 = sadd.s32 %s171, %s172
      %s174 = smul.addr %s173, 4
      %s175 = scalar_lea.vmem %s2, %s174
      %s176 = smul.u32 2, %s18
      %p177 = scmp.lt.s32.totalorder %s17, 1
      %s178 = scalar_select %p177, %s17, 1
      %p179 = scmp.lt.s32.totalorder %s176, 1
      %s180 = scalar_select %p179, %s176, 1
      %s181 = smul.addr %s178, 2
      %s182 = sadd.s32 %s180, %s181
      %s183 = smul.addr %s182, 4
      %s184 = scalar_lea.vmem %s0, %s183
      %s185 = smul.u32 2, %s18
      %p186 = scmp.lt.s32.totalorder %s17, 1
      %s187 = scalar_select %p186, %s17, 1
      %s188 = smul.addr %s187, 4
      %s189 = scalar_lea.vmem %s1, %s188
      %s190 = smul.u32 2, %s18
      %p191 = scmp.lt.s32.totalorder %s17, 1
      %s192 = scalar_select %p191, %s17, 1
      %p193 = scmp.lt.s32.totalorder %s190, 1
      %s194 = scalar_select %p193, %s190, 1
      %s195 = smul.addr %s192, 2
      %s196 = sadd.s32 %s194, %s195
      %s197 = smul.addr %s196, 4
      %s198 = scalar_lea.vmem %s2, %s197
      %s199 = smul.u32 2, %s18
      %v200 = vld [vmem:[%s184] sm:$0xff]
      %v201 = vld [vmem:[%s189] sm:$0xf]
      %203 = vset.pattern.permute.xlu0 0
      %204 = vperm.xlu0 %203, %v201
      %v205 = vpop.permute.xlu0 %204
      %v207 = vunpack.c.l.s4 839922192
      %v208 = vunpack.c.0.s8 %v207
      %v209 = vperm.slane %v205, %v208
      %v211 = vmul.f32 %v200, %v209
      %212 = vst [vmem:[%s198] sm:$0xff] %v211
      %s213 = smul.u32 2, %s18
      %p214 = scmp.lt.s32.totalorder %s17, 1
      %s215 = scalar_select %p214, %s17, 1
      %p216 = scmp.lt.s32.totalorder %s213, 1
      %s217 = scalar_select %p216, %s213, 1
      %s218 = smul.addr %s215, 2
      %s219 = sadd.s32 %s217, %s218
      %s220 = smul.addr %s219, 4
      %s221 = scalar_lea.vmem %s2, %s220
      // Predicated region
      $region29: #{ca_module.3} parent=27 // pred_check
        %p222 = pneg %p99
      $region30: #{ca_module.3} parent=27 // pred_check_branch
        %224 = sbr.rel (%p222) target = $region32
      $region31: #{ca_module.3} parent=27 // pred_region
        %s225 = smul.u32 2, %s18
      $region32: #{ca_module.3} parent=27 // pred_fallthru
        _
    $region28: #{ca_module.3} parent=5 // pred_fallthru
      _
    %p226 = scmp.le.s32.totalorder 2, %s8
    // Predicated region
    $region33: #{ca_module.3} parent=5 // pred_check
      %p227 = pneg %p226
    $region34: #{ca_module.3} parent=5 // pred_check_branch
      %229 = sbr.rel (%p227) target = $region36
    $region35: #{ca_module.3} parent=5 // pred_region
      %s230 = ssub.s32 %s8, 2
      // Predicated region
      $region37: #{ca_module.3} parent=35 // pred_check
        %p231 = pneg %p105
      $region38: #{ca_module.3} parent=35 // pred_check_branch
        %233 = sbr.rel (%p231) target = $region40
      $region39: #{ca_module.3} parent=35 // pred_region
        %s234 = smul.u32 2, %s20
        %p235 = scmp.lt.s32.totalorder %s19, 1
        %s236 = scalar_select %p235, %s19, 1
        %p237 = scmp.lt.s32.totalorder %s234, 1
        %s238 = scalar_select %p237, %s234, 1
        %s239 = smul.addr %s236, 2
        %s240 = sadd.s32 %s238, %s239
        %s241 = smul.addr %s240, 4
        %s242 = scalar_lea.vmem %s2, %s241
      $region40: #{ca_module.3} parent=35 // pred_fallthru
        _
    $region36: #{ca_module.3} parent=5 // pred_fallthru
      _
  $region6: #{ca_module.3} parent=0 // loop_footer
    %s12 = sadd.s32 1, %s8
  $region7: #{ca_module.3} parent=0 // loop_footer_branch
    %7 = sbr.rel target = $region3
  $region8: #{ca_module.3} parent=0 // loop_exit
    _

// kernel: ca_module.2
$region0: #{ca_module.2}
  #allocation0 [shape = 'u32[]', space=smem, size = 0x4, offset = 0x4, fixed_abs, tag = 'smem constant byte address 0x4 - core index']
  #allocation1 [shape = 'u32[72,128]{1,0:T(1,128)}', space=vmem, size = 0x9000, scoped, tag = 'internal scratch']
  #allocation2 [shape = 'f32[1,4]{1,0:T(1,128)}', space=vmem, size = 0x200, scoped, tag = 'scratch operand']
  %s0 = inlined_call_operand.vmem [shape: f32[2,4,256], index: 0, kind: input, shape index: {}]
  %s1 = inlined_call_operand.vmem [shape: f32[4,2], index: 1, kind: input, shape index: {}]
  %s2 = inlined_call_operand.vmem [shape: f32[1,2], index: 2, kind: input, shape index: {}]
  %s3 = inlined_call_operand.vmem [shape: f32[2,4], index: 3, kind: input, shape index: {}]
  %s4 = inlined_call_operand.vmem [shape: f32[1,4], index: 4, kind: input, shape index: {}]
  %s5 = inlined_call_operand.vmem [shape: f32[2,4,1], index: 5, kind: output, shape index: {}]
  %s6 = sld [smem:[#allocation0]]
  $region61: #{ca_module.2} parent=0
    _
  %s8 = ssub.s32 1, %s6
  %s9 = scalar_select 0, %s8, %s6
  loop: start=0, step=1, limit=4
  $region2: #{ca_module.2} parent=0 // loop_pre_header
    _
  $region3: #{ca_module.2} parent=0 // loop_header
    %s11 = sphi 0, %s15
    %p12 = scmp.ge.s32.totalorder %s11, 4
    %s18 = sphi 0, %s30
    %s19 = sphi 0, %s26
    %s20 = sphi 0, %s18
    %s21 = sphi 0, %s19
    %s22 = sphi 0, %s20
    %s23 = sphi 0, %s21
    %s35 = sphi 0, %s37
    %s38 = sphi 0, %s35
    %s39 = sphi 0, %s38
    %s55 = sphi 0, %s39
    %s59 = sphi 0, %s59
    %s61 = sphi 0, %s59
    %s62 = sphi 0, %s61
    %s76 = sphi 0, %s62
    %s80 = sphi 0, %s80
    %s82 = sphi 0, %s80
    %s83 = sphi 0, %s82
    %s97 = sphi 0, %s83
    %s101 = sphi 0, %s101
    %s103 = sphi 0, %s101
    %s104 = sphi 0, %s103
    %s118 = sphi 0, %s104
    %s122 = sphi 0, %s122
    %s124 = sphi 0, %s122
    %s125 = sphi 0, %s124
    %s139 = sphi 0, %s125
    %s145 = sphi 0, %s147
    %s148 = sphi 0, %s145
    %s149 = sphi 0, %s148
    %s165 = sphi 0, %s149
  $region4: #{ca_module.2} parent=0 // loop_header_branch
    %14 = sbr.rel (%p12) target = $region8
  $region5: #{ca_module.2} parent=0 // loop_body
    %s16 = ssub.s32 %s11, 1
    %s17 = ssub.s32 %s11, 2
    %s24 = sadd.s32 1, %s19
    %p25 = scmp.ge.s32.totalorder %s24, 1
    %s26 = scalar_select %p25, 0, %s24
    %s27 = sadd.s32 1, %s18
    %s28 = scalar_select %p25, %s27, %s18
    %p29 = scmp.ge.s32.totalorder %s28, 2
    %s30 = scalar_select %p29, 0, %s28
    %s31 = ssub.s32 %s18, %s30
    %s32 = ssub.s32 %s19, %s26
    %s33 = sor.u32 %s31, %s32
    %p34 = scmp.eq.s32.totalorder %s33, 0
    %s36 = sadd.s32 %s35, 1
    %s37 = scalar_select %p34, %s35, %s36
    %p40 = pneg %p34
    %p41 = scmp.eq.s32.totalorder %s11, 1
    %p42 = por %p40, %p41
    %p43 = scmp.ne.s32.totalorder %s35, %s38
    %p44 = scmp.eq.s32.totalorder %s11, 0
    %p45 = por %p43, %p44
    %p46 = scmp.ne.s32.totalorder %s35, %s38
    %p47 = scmp.eq.s32.totalorder %s16, 1
    %p48 = por %p46, %p47
    %p49 = scmp.ne.s32.totalorder %s38, %s39
    %p50 = scmp.eq.s32.totalorder %s16, 0
    %p51 = por %p49, %p50
    %p52 = scmp.ne.s32.totalorder %s38, %s39
    %p53 = scmp.eq.s32.totalorder %s17, 1
    %p54 = por %p52, %p53
    %p56 = scmp.ne.s32.totalorder %s39, %s55
    %p57 = scmp.eq.s32.totalorder %s17, 0
    %p58 = por %p56, %p57
    %s60 = sadd.s32 %s59, 1
    %p63 = scmp.eq.s32.totalorder %s11, 1
    %p64 = scmp.ne.s32.totalorder %s59, %s61
    %p65 = scmp.eq.s32.totalorder %s11, 0
    %p66 = por %p64, %p65
    %p67 = scmp.ne.s32.totalorder %s59, %s61
    %p68 = scmp.eq.s32.totalorder %s16, 1
    %p69 = por %p67, %p68
    %p70 = scmp.ne.s32.totalorder %s61, %s62
    %p71 = scmp.eq.s32.totalorder %s16, 0
    %p72 = por %p70, %p71
    %p73 = scmp.ne.s32.totalorder %s61, %s62
    %p74 = scmp.eq.s32.totalorder %s17, 1
    %p75 = por %p73, %p74
    %p77 = scmp.ne.s32.totalorder %s62, %s76
    %p78 = scmp.eq.s32.totalorder %s17, 0
    %p79 = por %p77, %p78
    %s81 = sadd.s32 %s80, 1
    %p84 = scmp.eq.s32.totalorder %s11, 1
    %p85 = scmp.ne.s32.totalorder %s80, %s82
    %p86 = scmp.eq.s32.totalorder %s11, 0
    %p87 = por %p85, %p86
    %p88 = scmp.ne.s32.totalorder %s80, %s82
    %p89 = scmp.eq.s32.totalorder %s16, 1
    %p90 = por %p88, %p89
    %p91 = scmp.ne.s32.totalorder %s82, %s83
    %p92 = scmp.eq.s32.totalorder %s16, 0
    %p93 = por %p91, %p92
    %p94 = scmp.ne.s32.totalorder %s82, %s83
    %p95 = scmp.eq.s32.totalorder %s17, 1
    %p96 = por %p94, %p95
    %p98 = scmp.ne.s32.totalorder %s83, %s97
    %p99 = scmp.eq.s32.totalorder %s17, 0
    %p100 = por %p98, %p99
    %s102 = sadd.s32 %s101, 1
    %p105 = scmp.eq.s32.totalorder %s11, 1
    %p106 = scmp.ne.s32.totalorder %s101, %s103
    %p107 = scmp.eq.s32.totalorder %s11, 0
    %p108 = por %p106, %p107
    %p109 = scmp.ne.s32.totalorder %s101, %s103
    %p110 = scmp.eq.s32.totalorder %s16, 1
    %p111 = por %p109, %p110
    %p112 = scmp.ne.s32.totalorder %s103, %s104
    %p113 = scmp.eq.s32.totalorder %s16, 0
    %p114 = por %p112, %p113
    %p115 = scmp.ne.s32.totalorder %s103, %s104
    %p116 = scmp.eq.s32.totalorder %s17, 1
    %p117 = por %p115, %p116
    %p119 = scmp.ne.s32.totalorder %s104, %s118
    %p120 = scmp.eq.s32.totalorder %s17, 0
    %p121 = por %p119, %p120
    %s123 = sadd.s32 %s122, 1
    %p126 = scmp.eq.s32.totalorder %s11, 1
    %p127 = scmp.ne.s32.totalorder %s122, %s124
    %p128 = scmp.eq.s32.totalorder %s11, 0
    %p129 = por %p127, %p128
    %p130 = scmp.ne.s32.totalorder %s122, %s124
    %p131 = scmp.eq.s32.totalorder %s16, 1
    %p132 = por %p130, %p131
    %p133 = scmp.ne.s32.totalorder %s124, %s125
    %p134 = scmp.eq.s32.totalorder %s16, 0
    %p135 = por %p133, %p134
    %p136 = scmp.ne.s32.totalorder %s124, %s125
    %p137 = scmp.eq.s32.totalorder %s17, 1
    %p138 = por %p136, %p137
    %p140 = scmp.ne.s32.totalorder %s125, %s139
    %p141 = scmp.eq.s32.totalorder %s17, 0
    %p142 = por %p140, %p141
    %s143 = ssub.s32 %s18, %s30
    %p144 = scmp.eq.s32.totalorder %s143, 0
    %s146 = sadd.s32 %s145, 1
    %s147 = scalar_select %p144, %s145, %s146
    %p150 = pneg %p144
    %p151 = scmp.eq.s32.totalorder %s11, 1
    %p152 = por %p150, %p151
    %p153 = scmp.ne.s32.totalorder %s145, %s148
    %p154 = scmp.eq.s32.totalorder %s11, 0
    %p155 = por %p153, %p154
    %p156 = scmp.ne.s32.totalorder %s145, %s148
    %p157 = scmp.eq.s32.totalorder %s16, 1
    %p158 = por %p156, %p157
    %p159 = scmp.ne.s32.totalorder %s148, %s149
    %p160 = scmp.eq.s32.totalorder %s16, 0
    %p161 = por %p159, %p160
    %p162 = scmp.ne.s32.totalorder %s148, %s149
    %p163 = scmp.eq.s32.totalorder %s17, 1
    %p164 = por %p162, %p163
    %p166 = scmp.ne.s32.totalorder %s149, %s165
    %p167 = scmp.eq.s32.totalorder %s17, 0
    %p168 = por %p166, %p167
    %p169 = scmp.le.s32.totalorder 1, %s11
    %p170 = scmp.lt.s32.totalorder %s11, 3
    %p171 = pnand %p169, %p170
    %p172 = pneg %p171
    // Predicated region
    $region9: #{ca_module.2} parent=5 // pred_check
      _
    $region10: #{ca_module.2} parent=5 // pred_check_branch
      %174 = sbr.rel (%p171) target = $region12
    $region11: #{ca_module.2} parent=5 // pred_region
      %s175 = ssub.s32 %s11, 1
      // Predicated region
      $region13: #{ca_module.2} parent=11 // pred_check
        %p176 = pneg %p72
      $region14: #{ca_module.2} parent=11 // pred_check_branch
        %178 = sbr.rel (%p176) target = $region16
      $region15: #{ca_module.2} parent=11 // pred_region
        _
      $region16: #{ca_module.2} parent=11 // pred_fallthru
        _
      // Predicated region
      $region17: #{ca_module.2} parent=11 // pred_check
        %p179 = pneg %p93
      $region18: #{ca_module.2} parent=11 // pred_check_branch
        %181 = sbr.rel (%p179) target = $region20
      $region19: #{ca_module.2} parent=11 // pred_region
        _
      $region20: #{ca_module.2} parent=11 // pred_fallthru
        _
      // Predicated region
      $region21: #{ca_module.2} parent=11 // pred_check
        %p182 = pneg %p114
      $region22: #{ca_module.2} parent=11 // pred_check_branch
        %184 = sbr.rel (%p182) target = $region24
      $region23: #{ca_module.2} parent=11 // pred_region
        _
      $region24: #{ca_module.2} parent=11 // pred_fallthru
        _
      // Predicated region
      $region25: #{ca_module.2} parent=11 // pred_check
        %p185 = pneg %p135
      $region26: #{ca_module.2} parent=11 // pred_check_branch
        %187 = sbr.rel (%p185) target = $region28
      $region27: #{ca_module.2} parent=11 // pred_region
        _
      $region28: #{ca_module.2} parent=11 // pred_fallthru
        _
    $region12: #{ca_module.2} parent=5 // pred_fallthru
      _
    %p188 = scmp.lt.s32.totalorder %s11, 2
    // Predicated region
    $region29: #{ca_module.2} parent=5 // pred_check
      %p189 = pneg %p188
    $region30: #{ca_module.2} parent=5 // pred_check_branch
      %191 = sbr.rel (%p189) target = $region32
    $region31: #{ca_module.2} parent=5 // pred_region
      // Predicated region
      $region33: #{ca_module.2} parent=31 // pred_check
        %p192 = pneg %p45
      $region34: #{ca_module.2} parent=31 // pred_check_branch
        %194 = sbr.rel (%p192) target = $region36
      $region35: #{ca_module.2} parent=31 // pred_region
        %s195 = smul.u32 2, %s19
        %p196 = scmp.lt.s32.totalorder %s18, 1
        %s197 = scalar_select %p196, %s18, 1
        %p198 = scmp.lt.s32.totalorder %s195, 1
        %s199 = scalar_select %p198, %s195, 1
        %s200 = smul.addr %s197, 2
        %s201 = sadd.s32 %s199, %s200
        %s202 = smul.addr %s201, 4
        %s203 = scalar_lea.vmem %s0, %s202
        %s204 = smul.u32 2, %s19
      $region36: #{ca_module.2} parent=31 // pred_fallthru
        _
    $region32: #{ca_module.2} parent=5 // pred_fallthru
      _
    %p205 = scmp.le.s32.totalorder 1, %s11
    %p206 = scmp.lt.s32.totalorder %s11, 3
    %p207 = pnand %p205, %p206
    %p208 = pneg %p207
    // Predicated region
    $region37: #{ca_module.2} parent=5 // pred_check
      _
    $region38: #{ca_module.2} parent=5 // pred_check_branch
      %210 = sbr.rel (%p207) target = $region40
    $region39: #{ca_module.2} parent=5 // pred_region
      %s211 = ssub.s32 %s11, 1
      %s212 = smul.u32 2, %s21
      %p213 = scmp.lt.s32.totalorder %s20, 1
      %s214 = scalar_select %p213, %s20, 1
      %p215 = scmp.lt.s32.totalorder %s212, 1
      %s216 = scalar_select %p215, %s212, 1
      %s217 = smul.addr %s214, 2
      %s218 = sadd.s32 %s216, %s217
      %s219 = smul.addr %s218, 4
      %s220 = scalar_lea.vmem %s0, %s219
      %p221 = pneg %p51
      %p222 = pneg %p48
      %p223 = pneg %p72
      %p224 = pneg %p69
      %p225 = pneg %p93
      %p226 = pneg %p90
      %p227 = pneg %p114
      %p228 = pneg %p111
      %p229 = pneg %p135
      %p230 = pneg %p132
      %p231 = pneg %p161
      %p232 = pneg %p158
      %p233 = scmp.lt.s32.totalorder %s20, 1
      %s234 = scalar_select %p233, %s20, 1
      %s235 = smul.addr %s234, 4
      %s236 = scalar_lea.vmem %s5, %s235
      %s237 = smul.u32 2, %s21
      %p238 = scmp.lt.s32.totalorder %s20, 1
      %s239 = scalar_select %p238, %s20, 1
      %p240 = scmp.lt.s32.totalorder %s237, 1
      %s241 = scalar_select %p240, %s237, 1
      %s242 = smul.addr %s239, 2
      %s243 = sadd.s32 %s241, %s242
      %s244 = smul.addr %s243, 4
      %s245 = scalar_lea.vmem %s0, %s244
      %s246 = smul.u32 2, %s21
      %p247 = scmp.lt.s32.totalorder %s20, 1
      %s248 = scalar_select %p247, %s20, 1
      %s249 = smul.addr %s248, 4
      %s250 = scalar_lea.vmem %s5, %s249
      %p251 = scmp.eq.s32.totalorder %s21, 0
      // Predicated region
      $region41: #{ca_module.2} parent=39 // pred_check
        %p252 = pneg %p251
      $region42: #{ca_module.2} parent=39 // pred_check_branch
        %254 = sbr.rel (%p252) target = $region44
      $region43: #{ca_module.2} parent=39 // pred_region
        %vm255 = vcmask 24576
        %256 = vst.msk [vmem:[#allocation2] sm:$0x1] %vm255, 0.0
      $region44: #{ca_module.2} parent=39 // pred_fallthru
        _
      %v257 = vld [vmem:[%s245] sm:$0xf]
      %v258 = vld [vmem:[%s245 + $0x4] sm:$0xf]
      %v259 = vadd.f32 %v257, %v258
      %vm260 = vcmask 1043456
      %v261 = vsel %vm260, %v259, 0.0
      %262 = vadd.xlane.f32.xlu0 %v261
      %v263 = vpop.xlane.xlu0 %262
      %v264 = vld [vmem:[#allocation2] sm:$0x1]
      %v266 = vperm.slane %v263, 0
      %v267 = vperm.slane %v263, 1
      %v268 = vperm.slane %v263, 2
      %v269 = vperm.slane %v263, 3
      %270 = vst [vmem:[#allocation1] ss:$9 sm:$0xff] %v266
      %s271 = scalar_lea.vmem [#allocation1], 1
      %272 = vst [vmem:[%s271] ss:$9 sm:$0xff] %v267
      %s273 = scalar_lea.vmem [#allocation1], 2
      %274 = vst [vmem:[%s273] ss:$9 sm:$0xff] %v268
      %s275 = scalar_lea.vmem [#allocation1], 3
      %276 = vst [vmem:[%s275] ss:$9 sm:$0xff] %v269
      %v277 = vld [vmem:[#allocation1] sm:$0xff]
      %278 = vset.pattern.permute.xlu0 0
      %279 = vperm.xlu0 %278, %v277
      %v280 = vpop.permute.xlu0 %279
      %v281 = vlaneseq
      %v282 = vand.u32 %v281, 127
      %v283 = vperm.slane %v280, %v282
      %v285 = vadd.f32 %v264, %v283
      %vm286 = vcmask 24576
      %287 = vst.msk [vmem:[#allocation2] sm:$0x1] %vm286, %v285
      // Predicated region
      $region45: #{ca_module.2} parent=39 // pred_check
        %p288 = pneg %p251
      $region46: #{ca_module.2} parent=39 // pred_check_branch
        %290 = sbr.rel (%p288) target = $region48
      $region47: #{ca_module.2} parent=39 // pred_region
        %v291 = vld [vmem:[#allocation2] sm:$0x1]
        %v292 = vmul.f32 %v291, 0.00390625
        %v293 = vld [vmem:[%s1] sm:$0xf]
        %v294 = vld [vmem:[%s2] sm:$0x1]
        %vm295 = vcmask 31744
        %v297 = vsel %vm295, %v292, 0
        %v300 = vsel %vm260, %v293, 0
        %302 = vmatpush.msra.mxu0 0.0
        %303 = vmatpush.msra.mxu0 0.0
        %304 = vmatpush.msra.mxu0 0.0
        %305 = vmatpush.msra.mxu0 0.0
        %306 = vmatpush.msra.mxu0 0.0
        %307 = vmatpush.msra.mxu0 0.0
        %308 = vmatpush.msra.mxu0 0.0
        %309 = vmatpush.msra.mxu0 0.0
        %310 = vmatpush.msra.mxu0 0.0
        %311 = vmatpush.msra.mxu0 0.0
        %312 = vmatpush.msra.mxu0 0.0
        %313 = vmatpush.msra.mxu0 0.0
        %314 = vmatpush.msra.mxu0 0.0
        %315 = vmatpush.msra.mxu0 0.0
        %316 = vmatpush.msra.mxu0 0.0
        %317 = vmatpush.msra.mxu0 %v300
        %318 = vmatmul.f32.gmra.mxu0 %v297
        %v319 = vpop.f32.mrf.mxu0
        %v320 = vadd.f32 %v294, %v319
        %321 = vdwg.mxu0
        %v322 = vmax.f32 %v320, 0.0
        %v323 = vld [vmem:[%s3] sm:$0x3]
        %v324 = vld [vmem:[%s4] sm:$0x1]
        %vm325 = vcmask 15360
        %v327 = vsel %vm325, %v322, 0
        %vm329 = vcmask 1041408
        %v331 = vsel %vm329, %v323, 0
        %333 = vmatpush.msra.mxu0 0.0
        %334 = vmatpush.msra.mxu0 0.0
        %335 = vmatpush.msra.mxu0 0.0
        %336 = vmatpush.msra.mxu0 0.0
        %337 = vmatpush.msra.mxu0 0.0
        %338 = vmatpush.msra.mxu0 0.0
        %339 = vmatpush.msra.mxu0 0.0
        %340 = vmatpush.msra.mxu0 0.0
        %341 = vmatpush.msra.mxu0 0.0
        %342 = vmatpush.msra.mxu0 0.0
        %343 = vmatpush.msra.mxu0 0.0
        %344 = vmatpush.msra.mxu0 0.0
        %345 = vmatpush.msra.mxu0 0.0
        %346 = vmatpush.msra.mxu0 0.0
        %347 = vmatpush.msra.mxu0 0.0
        %348 = vmatpush.msra.mxu0 %v331
        %349 = vmatmul.f32.gmra.mxu0 %v327
        %v350 = vpop.f32.mrf.mxu0
        %v351 = vadd.f32 %v324, %v350
        %352 = vdwg.mxu0
        %v353 = vxor.u32 %v351, 2147483648
        %v354 = vmul.f32 %v353, 1.442695
        %v355 = vpow.pop %v354
        %v356 = vadd.f32 %v355, 1.0
        %v357 = vrcp.pop %v356
        %v358 = vmul.f32 %v356, %v357
        %v359 = vsub.f32 1.0, %v358
        %v360 = vmul.f32 %v357, %v359
        %v361 = vadd.f32 %v357, %v360
        %vm362 = vweird.f32 %v356
        %vm363 = vweird.f32 %v357
        %vm364 = vmor %vm362, %vm363
        %v365 = vsel %vm364, %v357, %v361
        %v366 = vand.u32 2147483647, %v356
        %vm367 = vcmp.eq.f32.partialorder %v366, 8.507059e+37
        %v368 = vand.u32 %v356, 2147483648
        %v369 = vor.u32 1.1754944e-38, %v368
        %v370 = vsel %vm367, %v369, %v365
        %v371 = vmul.f32 1.0, %v370
        %v372 = vperm.slane %v371, 0
        %v373 = vlaneseq
        %v374 = vshrl.u32 %v373, 7
        %376 = vset.pattern.permute.xlu0 %v374
        %377 = vperm.xlu0 %376, %v372
        %v378 = vpop.permute.xlu0 %377
        %vm379 = vcmask 3072
        %380 = vst.msk [vmem:[%s250] sm:$0xf] %vm379, %v378
      $region48: #{ca_module.2} parent=39 // pred_fallthru
        _
      %p381 = scmp.lt.s32.totalorder %s20, 1
      %s382 = scalar_select %p381, %s20, 1
      %s383 = smul.addr %s382, 4
      %s384 = scalar_lea.vmem %s5, %s383
      // Predicated region
      $region49: #{ca_module.2} parent=39 // pred_check
        %p385 = pneg %p158
      $region50: #{ca_module.2} parent=39 // pred_check_branch
        %387 = sbr.rel (%p385) target = $region52
      $region51: #{ca_module.2} parent=39 // pred_region
        _
      $region52: #{ca_module.2} parent=39 // pred_fallthru
        _
    $region40: #{ca_module.2} parent=5 // pred_fallthru
      _
    %p388 = scmp.le.s32.totalorder 2, %s11
    // Predicated region
    $region53: #{ca_module.2} parent=5 // pred_check
      %p389 = pneg %p388
    $region54: #{ca_module.2} parent=5 // pred_check_branch
      %391 = sbr.rel (%p389) target = $region56
    $region55: #{ca_module.2} parent=5 // pred_region
      %s392 = ssub.s32 %s11, 2
      // Predicated region
      $region57: #{ca_module.2} parent=55 // pred_check
        %p393 = pneg %p164
      $region58: #{ca_module.2} parent=55 // pred_check_branch
        %395 = sbr.rel (%p393) target = $region60
      $region59: #{ca_module.2} parent=55 // pred_region
        %p396 = scmp.lt.s32.totalorder %s22, 1
        %s397 = scalar_select %p396, %s22, 1
        %s398 = smul.addr %s397, 4
        %s399 = scalar_lea.vmem %s5, %s398
      $region60: #{ca_module.2} parent=55 // pred_fallthru
        _
    $region56: #{ca_module.2} parent=5 // pred_fallthru
      _
  $region6: #{ca_module.2} parent=0 // loop_footer
    %s15 = sadd.s32 1, %s11
  $region7: #{ca_module.2} parent=0 // loop_footer_branch
    %10 = sbr.rel target = $region3
  $region8: #{ca_module.2} parent=0 // loop_exit
    _

</llo_original>
